<compile_context>
chip_gen: v5e
topology: v5e:2x2
jax: 0.10.0
libtpu: 0.0.40
codegen_flags: <defaults>
</compile_context>

<pallas_src>
import functools
import math

import jax
import jax.numpy as jnp
from jax import lax
from jax.experimental import pallas as pl
from jax.experimental.pallas import tpu as pltpu

HIDDEN = 64


def _gelu_exact(v):
    # nn.GELU() default = exact (erf) GELU.
    return 0.5 * v * (1.0 + lax.erf(v * (1.0 / math.sqrt(2.0))))


def _lstm_recurrence_kernel(e_ref, lens_ref, wih_ref, whh_ref, bg_ref,
                            out_ref, h_scr, c_scr):
    """One time-chunk of the LSTM recurrence.

    e_ref   : (T_BLK, B, H)    encoder outputs (64 lanes, streamed from HBM)
    lens_ref: (B, 1) int32     valid sequence lengths (constant index_map)
    wih_ref : (H, 4H)          input->gates weights
    whh_ref : (H, 4H)          hidden->gates weights
    bg_ref  : (1, 4H)          b_ih + b_hh
    out_ref : (T_BLK, B, H)    masked hidden states (zero at padded steps)
    h_scr/c_scr: (B, H)        LSTM state carried across grid steps
    """
    t_blk, b, hdim = e_ref.shape
    g4 = 4 * hdim
    blk = pl.program_id(0)

    @pl.when(blk == 0)
    def _init():
        h_scr[...] = jnp.zeros_like(h_scr)
        c_scr[...] = jnp.zeros_like(c_scr)

    wih = wih_ref[...]                      # (H, 4H) fetched once per chunk
    whh = whh_ref[...]                      # (H, 4H)
    bg = bg_ref[...]                        # (1, 4H)
    lens = lens_ref[...]                    # (B, 1) int32
    t0 = blk * t_blk

    # Lane-class mask (g-gate lanes use tanh, i/f/o lanes use sigmoid), hoisted
    # out of the timestep loop (broadcasts are not CSE'd by JAX).
    lane = lax.broadcasted_iota(jnp.int32, (b, g4), 1)
    tanh_lane = (lane >= 2 * hdim) & (lane < 3 * hdim)

    def step(s, carry):
        h, c = carry
        # e@W_ih + bias is independent of the carry -> scheduler hoists it off
        # the recurrent chain.  Only h@W_hh is truly sequential.
        gates = (jnp.dot(e_ref[s], wih, preferred_element_type=jnp.float32)
                 + bg
                 + jnp.dot(h, whh, preferred_element_type=jnp.float32))
        # Single full-width tanh: sigmoid(x) = 0.5 * (1 + tanh(x/2)).
        # PyTorch LSTM gate order: i, f, g, o.
        t = jnp.tanh(jnp.where(tanh_lane, gates, 0.5 * gates))
        act = jnp.where(tanh_lane, t, 0.5 + 0.5 * t)
        i_g = act[:, 0 * hdim:1 * hdim]
        f_g = act[:, 1 * hdim:2 * hdim]
        g_g = act[:, 2 * hdim:3 * hdim]
        o_g = act[:, 3 * hdim:4 * hdim]
        c_new = f_g * c + i_g * g_g
        h_new = o_g * jnp.tanh(c_new)
        # pack_padded_sequence semantics: invalid steps don't update the state,
        # pad_packed_sequence zero-fills their outputs.
        valid = (t0 + s) < lens                         # (B, 1) bool
        out_ref[s] = jnp.where(valid, h_new, 0.0)
        return (jnp.where(valid, h_new, h), jnp.where(valid, c_new, c))

    h_fin, c_fin = lax.fori_loop(0, t_blk, step, (h_scr[...], c_scr[...]),
                                 unroll=True)
    h_scr[...] = h_fin
    c_scr[...] = c_fin


@functools.partial(jax.jit, static_argnames=("t_blk",))
def hoare_lstm_forward(x, data_len, p, t_blk=16):
    """x: (B, T, F) float32 batch-first; data_len: (B,) int (max == T)."""
    B, T, F = x.shape
    H = HIDDEN
    B_pad = ((B + 7) // 8) * 8                     # sublane granularity
    T_pad = ((T + t_blk - 1) // t_blk) * t_blk     # time-chunk granularity

    x32 = x.astype(jnp.float32)

    # ---- hoisted encoder (one large matmul pair over all B*T rows) ----
    e = _gelu_exact(x32 @ p['w1'] + p['b1']) @ p['w2'] + p['b2']        # (B,T,H)

    # pad batch/time, go time-major (64 lanes per row streamed into the kernel)
    e = jnp.pad(e, ((0, B_pad - B), (0, T_pad - T), (0, 0)))
    e_tm = jnp.transpose(e, (1, 0, 2))                                  # (T_pad,B_pad,H)
    lens = jnp.pad(data_len.astype(jnp.int32), (0, B_pad - B))[:, None]  # (B_pad,1)
    b_gate = (p['bih'] + p['bhh']).reshape(1, 4 * H)                    # (1,4H)

    grid = (T_pad // t_blk,)
    h_tm = pl.pallas_call(
        _lstm_recurrence_kernel,
        out_shape=jax.ShapeDtypeStruct((T_pad, B_pad, H), jnp.float32),
        grid=grid,
        in_specs=[
            pl.BlockSpec((t_blk, B_pad, H), lambda t: (t, 0, 0)),   # e (streamed)
            pl.BlockSpec((B_pad, 1), lambda t: (0, 0)),             # lens
            pl.BlockSpec((H, 4 * H), lambda t: (0, 0)),             # W_ih
            pl.BlockSpec((H, 4 * H), lambda t: (0, 0)),             # W_hh
            pl.BlockSpec((1, 4 * H), lambda t: (0, 0)),             # b_ih+b_hh
        ],
        out_specs=pl.BlockSpec((t_blk, B_pad, H), lambda t: (t, 0, 0)),
        scratch_shapes=[pltpu.VMEM((B_pad, H), jnp.float32),   # h state
                        pltpu.VMEM((B_pad, H), jnp.float32)],  # c state
        compiler_params=pltpu.CompilerParams(
            dimension_semantics=("arbitrary",)),               # recurrence over T
    )(e_tm, lens, p['wih'], p['whh'], b_gate)

    # ---- hoisted decoder (large matmul pair on the hidden states) ----
    h = jnp.transpose(h_tm[:T, :B], (1, 0, 2))                          # (B,T,H)
    y = _gelu_exact(h @ p['w3'] + p['b3']) @ p['w4'] + p['b4']          # (B,T,F)
    return y


def init_params(key, feature_dim, hidden=HIDDEN):
    """Deterministic synthetic parameters (PyTorch-style uniform fan-in init)."""
    ks = jax.random.split(key, 12)

    def u(k, shape, fan_in):
        bound = 1.0 / math.sqrt(fan_in)
        return jax.random.uniform(k, shape, jnp.float32, -bound, bound)

    return {
        'w1': u(ks[0], (feature_dim, hidden), feature_dim),
        'b1': u(ks[1], (1, hidden), feature_dim),
        'w2': u(ks[2], (hidden, hidden), hidden),
        'b2': u(ks[3], (1, hidden), hidden),
        'wih': u(ks[4], (hidden, 4 * hidden), hidden),
        'bih': u(ks[5], (1, 4 * hidden), hidden),
        'whh': u(ks[6], (hidden, 4 * hidden), hidden),
        'bhh': u(ks[7], (1, 4 * hidden), hidden),
        'w3': u(ks[8], (hidden, hidden), hidden),
        'b3': u(ks[9], (1, hidden), hidden),
        'w4': u(ks[10], (hidden, feature_dim), hidden),
        'b4': u(ks[11], (1, feature_dim), hidden),
    }


def ref_forward(x, data_len, p):
    """Pure-JAX reference (mirrors the PyTorch forward)."""
    B, T, F = x.shape
    H = HIDDEN
    g = _gelu_exact
    e = g(x @ p['w1'] + p['b1']) @ p['w2'] + p['b2']                    # (B, T, H)
    mask = (jnp.arange(T)[None, :] < data_len[:, None]).astype(jnp.float32)

    def step(carry, inp):
        h, c = carry
        e_t, m_t = inp
        gates = e_t @ p['wih'] + p['bih'] + h @ p['whh'] + p['bhh']
        i = jax.nn.sigmoid(gates[:, :H])
        f = jax.nn.sigmoid(gates[:, H:2 * H])
        gg = jnp.tanh(gates[:, 2 * H:3 * H])
        o = jax.nn.sigmoid(gates[:, 3 * H:])
        c_new = f * c + i * gg
        h_new = o * jnp.tanh(c_new)
        c2 = m_t * c_new + (1 - m_t) * c
        h2 = m_t * h_new + (1 - m_t) * h
        return (h2, c2), m_t * h_new

    e_tm = jnp.transpose(e, (1, 0, 2))
    m_tm = jnp.transpose(mask, (1, 0))[:, :, None]
    (_, _), hs = lax.scan(step, (jnp.zeros((B, H)), jnp.zeros((B, H))), (e_tm, m_tm))
    hs = jnp.transpose(hs, (1, 0, 2))                                    # (B, T, H)
    return g(hs @ p['w3'] + p['b3']) @ p['w4'] + p['b4']


if __name__ == "__main__":
    key = jax.random.PRNGKey(0)
    kx, kp = jax.random.split(key)

    B, T, F = 2, 8, 4
    x = jax.random.normal(kx, (B, T, F), dtype=jnp.float32)
    data_len = jnp.array([8, 5], dtype=jnp.int32)   # sorted descending, max == T
    params = init_params(kp, F)

    # t_blk=4 -> grid of 2 time-chunks, exercising the cross-chunk state carry.
    y = hoare_lstm_forward(x, data_len, params, t_blk=4)
    y = jax.block_until_ready(y)

    y_ref = ref_forward(x, data_len, params)
    assert y.shape == (B, T, F), y.shape
    assert jnp.allclose(y, y_ref, atol=1e-4, rtol=1e-4), "mismatch vs pure-JAX reference"
    print("KERNEL_OK")
</pallas_src>

<mosaic_0001>
module attributes {stable_mosaic.version = 11 : i64} {
  func.func @_lstm_recurrence_kernel(%arg0: i32, %arg1: memref<4x8x64xf32, #tpu.memory_space<vmem>>, %arg2: memref<8x1xi32, #tpu.memory_space<vmem>>, %arg3: memref<64x256xf32, #tpu.memory_space<vmem>>, %arg4: memref<64x256xf32, #tpu.memory_space<vmem>>, %arg5: memref<1x256xf32, #tpu.memory_space<vmem>>, %arg6: memref<4x8x64xf32, #tpu.memory_space<vmem>>, %arg7: memref<8x64xf32, #tpu.memory_space<vmem>>, %arg8: memref<8x64xf32, #tpu.memory_space<vmem>>) attributes {dimension_semantics = [#tpu.dimension_semantics<arbitrary>], iteration_bounds = array<i64: 2>, scalar_prefetch = 0 : i64, scratch_operands = 2 : i64, tpu.core_type = #tpu.core_type<tc>, window_params = [{transform_indices = @transform_0, window_bounds = array<i64: 4, 8, 64>}, {pipeline_mode = #tpu.pipeline_mode<synchronous>, transform_indices = @transform_1, window_bounds = array<i64: 8, 1>}, {pipeline_mode = #tpu.pipeline_mode<synchronous>, transform_indices = @transform_2, window_bounds = array<i64: 64, 256>}, {pipeline_mode = #tpu.pipeline_mode<synchronous>, transform_indices = @transform_3, window_bounds = array<i64: 64, 256>}, {pipeline_mode = #tpu.pipeline_mode<synchronous>, transform_indices = @transform_4, window_bounds = array<i64: 1, 256>}, {transform_indices = @transform_5, window_bounds = array<i64: 4, 8, 64>}]} {
    %c0_i32 = arith.constant 0 : i32
    %0 = arith.cmpi eq, %arg0, %c0_i32 : i32
    %1 = arith.extui %0 : i1 to i32
    %c0_i32_0 = arith.constant 0 : i32
    %2 = arith.cmpi ne, %1, %c0_i32_0 : i32
    scf.if %2 {
      %cst_57 = arith.constant 0.000000e+00 : f32
      %190 = vector.broadcast %cst_57 : f32 to vector<8x64xf32>
      %c0_58 = arith.constant 0 : index
      %c0_59 = arith.constant 0 : index
      %191 = vector.load %arg7[%c0_58, %c0_59] : memref<8x64xf32, #tpu.memory_space<vmem>>, vector<8x64xf32>
      tpu.vector_store %arg7[%c0_58, %c0_59], %190 {strides = array<i32>} : memref<8x64xf32, #tpu.memory_space<vmem>>, vector<8x64xf32>,
      %cst_60 = arith.constant 0.000000e+00 : f32
      %192 = vector.broadcast %cst_60 : f32 to vector<8x64xf32>
      %c0_61 = arith.constant 0 : index
      %c0_62 = arith.constant 0 : index
      %193 = vector.load %arg8[%c0_61, %c0_62] : memref<8x64xf32, #tpu.memory_space<vmem>>, vector<8x64xf32>
      tpu.vector_store %arg8[%c0_61, %c0_62], %192 {strides = array<i32>} : memref<8x64xf32, #tpu.memory_space<vmem>>, vector<8x64xf32>,
    } else {
    }
    %c0 = arith.constant 0 : index
    %c0_1 = arith.constant 0 : index
    %3 = vector.load %arg3[%c0, %c0_1] : memref<64x256xf32, #tpu.memory_space<vmem>>, vector<64x256xf32>
    %c0_2 = arith.constant 0 : index
    %c0_3 = arith.constant 0 : index
    %4 = vector.load %arg4[%c0_2, %c0_3] : memref<64x256xf32, #tpu.memory_space<vmem>>, vector<64x256xf32>
    %c0_4 = arith.constant 0 : index
    %c0_5 = arith.constant 0 : index
    %5 = vector.load %arg5[%c0_4, %c0_5] : memref<1x256xf32, #tpu.memory_space<vmem>>, vector<1x256xf32>
    %c0_6 = arith.constant 0 : index
    %c0_7 = arith.constant 0 : index
    %6 = vector.load %arg2[%c0_6, %c0_7] : memref<8x1xi32, #tpu.memory_space<vmem>>, vector<8x1xi32>
    %c4_i32 = arith.constant 4 : i32
    %7 = arith.muli %arg0, %c4_i32 : i32
    %8 = tpu.iota {dimensions = array<i32: 1>} : vector<8x256xi32>
    %c128_i32 = arith.constant 128 : i32
    %9 = vector.broadcast %c128_i32 : i32 to vector<8x256xi32>
    %10 = arith.cmpi sge, %8, %9 : vector<8x256xi32>
    %c192_i32 = arith.constant 192 : i32
    %11 = vector.broadcast %c192_i32 : i32 to vector<8x256xi32>
    %12 = arith.cmpi slt, %8, %11 : vector<8x256xi32>
    %13 = arith.andi %10, %12 : vector<8x256xi1>
    %c0_8 = arith.constant 0 : index
    %c0_9 = arith.constant 0 : index
    %14 = vector.load %arg7[%c0_8, %c0_9] : memref<8x64xf32, #tpu.memory_space<vmem>>, vector<8x64xf32>
    %c0_10 = arith.constant 0 : index
    %c0_11 = arith.constant 0 : index
    %15 = vector.load %arg8[%c0_10, %c0_11] : memref<8x64xf32, #tpu.memory_space<vmem>>, vector<8x64xf32>
    %c0_i32_12 = arith.constant 0 : i32
    %16 = arith.index_cast %c0_i32_12 : i32 to index
    %c0_13 = arith.constant 0 : index
    %c0_14 = arith.constant 0 : index
    %17 = vector.load %arg1[%16, %c0_13, %c0_14] : memref<4x8x64xf32, #tpu.memory_space<vmem>>, vector<1x8x64xf32>
    %18 = vector.shape_cast %17 : vector<1x8x64xf32> to vector<8x64xf32>
    %cst = arith.constant dense<0.000000e+00> : vector<8x256xf32>
    %19 = tpu.matmul %18, %3, %cst {dimension_numbers = #tpu.dot_dimension_numbers<[1], [0], [0], [1], [0, 0, 1, 1], [], []>} : vector<8x64xf32>, vector<64x256xf32>, vector<8x256xf32> -> vector<8x256xf32>
    %20 = vector.broadcast %5 : vector<1x256xf32> to vector<8x256xf32>
    %21 = arith.addf %19, %20 : vector<8x256xf32>
    %cst_15 = arith.constant dense<0.000000e+00> : vector<8x256xf32>
    %22 = tpu.matmul %14, %4, %cst_15 {dimension_numbers = #tpu.dot_dimension_numbers<[1], [0], [0], [1], [0, 0, 1, 1], [], []>} : vector<8x64xf32>, vector<64x256xf32>, vector<8x256xf32> -> vector<8x256xf32>
    %23 = arith.addf %21, %22 : vector<8x256xf32>
    %cst_16 = arith.constant 5.000000e-01 : f32
    %24 = vector.broadcast %cst_16 : f32 to vector<8x256xf32>
    %25 = arith.mulf %24, %23 : vector<8x256xf32>
    %26 = arith.select %13, %23, %25 : vector<8x256xi1>, vector<8x256xf32>
    %27 = math.tanh %26 : vector<8x256xf32>
    %cst_17 = arith.constant 5.000000e-01 : f32
    %28 = vector.broadcast %cst_17 : f32 to vector<8x256xf32>
    %29 = arith.mulf %28, %27 : vector<8x256xf32>
    %cst_18 = arith.constant 5.000000e-01 : f32
    %30 = vector.broadcast %cst_18 : f32 to vector<8x256xf32>
    %31 = arith.addf %30, %29 : vector<8x256xf32>
    %32 = arith.select %13, %27, %31 : vector<8x256xi1>, vector<8x256xf32>
    %33 = vector.extract_strided_slice %32 {offsets = [0, 0], sizes = [8, 64], strides = [1, 1]} : vector<8x256xf32> to vector<8x64xf32>
    %34 = vector.extract_strided_slice %32 {offsets = [0, 64], sizes = [8, 64], strides = [1, 1]} : vector<8x256xf32> to vector<8x64xf32>
    %35 = vector.extract_strided_slice %32 {offsets = [0, 128], sizes = [8, 64], strides = [1, 1]} : vector<8x256xf32> to vector<8x64xf32>
    %36 = vector.extract_strided_slice %32 {offsets = [0, 192], sizes = [8, 64], strides = [1, 1]} : vector<8x256xf32> to vector<8x64xf32>
    %37 = arith.mulf %34, %15 : vector<8x64xf32>
    %38 = arith.mulf %33, %35 : vector<8x64xf32>
    %39 = arith.addf %37, %38 : vector<8x64xf32>
    %40 = math.tanh %39 : vector<8x64xf32>
    %41 = arith.mulf %36, %40 : vector<8x64xf32>
    %42 = arith.addi %7, %c0_i32_12 : i32
    %43 = vector.broadcast %42 : i32 to vector<8x1xi32>
    %44 = arith.cmpi slt, %43, %6 : vector<8x1xi32>
    %cst_19 = arith.constant 0.000000e+00 : f32
    %45 = vector.shape_cast %44 : vector<8x1xi1> to vector<8x1xi1>
    %46 = vector.broadcast %45 : vector<8x1xi1> to vector<8x64xi1>
    %47 = vector.broadcast %cst_19 : f32 to vector<8x64xf32>
    %48 = arith.select %46, %41, %47 : vector<8x64xi1>, vector<8x64xf32>
    %49 = arith.index_cast %c0_i32_12 : i32 to index
    %c0_20 = arith.constant 0 : index
    %c0_21 = arith.constant 0 : index
    %50 = vector.load %arg6[%49, %c0_20, %c0_21] : memref<4x8x64xf32, #tpu.memory_space<vmem>>, vector<1x8x64xf32>
    %51 = vector.shape_cast %50 : vector<1x8x64xf32> to vector<8x64xf32>
    %52 = vector.shape_cast %48 : vector<8x64xf32> to vector<1x8x64xf32>
    tpu.vector_store %arg6[%49, %c0_20, %c0_21], %52 {strides = array<i32>} : memref<4x8x64xf32, #tpu.memory_space<vmem>>, vector<1x8x64xf32>,
    %53 = vector.shape_cast %44 : vector<8x1xi1> to vector<8x1xi1>
    %54 = vector.broadcast %53 : vector<8x1xi1> to vector<8x64xi1>
    %55 = arith.select %54, %41, %14 : vector<8x64xi1>, vector<8x64xf32>
    %56 = vector.shape_cast %44 : vector<8x1xi1> to vector<8x1xi1>
    %57 = vector.broadcast %56 : vector<8x1xi1> to vector<8x64xi1>
    %58 = arith.select %57, %39, %15 : vector<8x64xi1>, vector<8x64xf32>
    %c1_i32 = arith.constant 1 : i32
    %59 = arith.index_cast %c1_i32 : i32 to index
    %c0_22 = arith.constant 0 : index
    %c0_23 = arith.constant 0 : index
    %60 = vector.load %arg1[%59, %c0_22, %c0_23] : memref<4x8x64xf32, #tpu.memory_space<vmem>>, vector<1x8x64xf32>
    %61 = vector.shape_cast %60 : vector<1x8x64xf32> to vector<8x64xf32>
    %cst_24 = arith.constant dense<0.000000e+00> : vector<8x256xf32>
    %62 = tpu.matmul %61, %3, %cst_24 {dimension_numbers = #tpu.dot_dimension_numbers<[1], [0], [0], [1], [0, 0, 1, 1], [], []>} : vector<8x64xf32>, vector<64x256xf32>, vector<8x256xf32> -> vector<8x256xf32>
    %63 = vector.broadcast %5 : vector<1x256xf32> to vector<8x256xf32>
    %64 = arith.addf %62, %63 : vector<8x256xf32>
    %cst_25 = arith.constant dense<0.000000e+00> : vector<8x256xf32>
    %65 = tpu.matmul %55, %4, %cst_25 {dimension_numbers = #tpu.dot_dimension_numbers<[1], [0], [0], [1], [0, 0, 1, 1], [], []>} : vector<8x64xf32>, vector<64x256xf32>, vector<8x256xf32> -> vector<8x256xf32>
    %66 = arith.addf %64, %65 : vector<8x256xf32>
    %cst_26 = arith.constant 5.000000e-01 : f32
    %67 = vector.broadcast %cst_26 : f32 to vector<8x256xf32>
    %68 = arith.mulf %67, %66 : vector<8x256xf32>
    %69 = arith.select %13, %66, %68 : vector<8x256xi1>, vector<8x256xf32>
    %70 = math.tanh %69 : vector<8x256xf32>
    %cst_27 = arith.constant 5.000000e-01 : f32
    %71 = vector.broadcast %cst_27 : f32 to vector<8x256xf32>
    %72 = arith.mulf %71, %70 : vector<8x256xf32>
    %cst_28 = arith.constant 5.000000e-01 : f32
    %73 = vector.broadcast %cst_28 : f32 to vector<8x256xf32>
    %74 = arith.addf %73, %72 : vector<8x256xf32>
    %75 = arith.select %13, %70, %74 : vector<8x256xi1>, vector<8x256xf32>
    %76 = vector.extract_strided_slice %75 {offsets = [0, 0], sizes = [8, 64], strides = [1, 1]} : vector<8x256xf32> to vector<8x64xf32>
    %77 = vector.extract_strided_slice %75 {offsets = [0, 64], sizes = [8, 64], strides = [1, 1]} : vector<8x256xf32> to vector<8x64xf32>
    %78 = vector.extract_strided_slice %75 {offsets = [0, 128], sizes = [8, 64], strides = [1, 1]} : vector<8x256xf32> to vector<8x64xf32>
    %79 = vector.extract_strided_slice %75 {offsets = [0, 192], sizes = [8, 64], strides = [1, 1]} : vector<8x256xf32> to vector<8x64xf32>
    %80 = arith.mulf %77, %58 : vector<8x64xf32>
    %81 = arith.mulf %76, %78 : vector<8x64xf32>
    %82 = arith.addf %80, %81 : vector<8x64xf32>
    %83 = math.tanh %82 : vector<8x64xf32>
    %84 = arith.mulf %79, %83 : vector<8x64xf32>
    %85 = arith.addi %7, %c1_i32 : i32
    %86 = vector.broadcast %85 : i32 to vector<8x1xi32>
    %87 = arith.cmpi slt, %86, %6 : vector<8x1xi32>
    %cst_29 = arith.constant 0.000000e+00 : f32
    %88 = vector.shape_cast %87 : vector<8x1xi1> to vector<8x1xi1>
    %89 = vector.broadcast %88 : vector<8x1xi1> to vector<8x64xi1>
    %90 = vector.broadcast %cst_29 : f32 to vector<8x64xf32>
    %91 = arith.select %89, %84, %90 : vector<8x64xi1>, vector<8x64xf32>
    %92 = arith.index_cast %c1_i32 : i32 to index
    %c0_30 = arith.constant 0 : index
    %c0_31 = arith.constant 0 : index
    %93 = vector.load %arg6[%92, %c0_30, %c0_31] : memref<4x8x64xf32, #tpu.memory_space<vmem>>, vector<1x8x64xf32>
    %94 = vector.shape_cast %93 : vector<1x8x64xf32> to vector<8x64xf32>
    %95 = vector.shape_cast %91 : vector<8x64xf32> to vector<1x8x64xf32>
    tpu.vector_store %arg6[%92, %c0_30, %c0_31], %95 {strides = array<i32>} : memref<4x8x64xf32, #tpu.memory_space<vmem>>, vector<1x8x64xf32>,
    %96 = vector.shape_cast %87 : vector<8x1xi1> to vector<8x1xi1>
    %97 = vector.broadcast %96 : vector<8x1xi1> to vector<8x64xi1>
    %98 = arith.select %97, %84, %55 : vector<8x64xi1>, vector<8x64xf32>
    %99 = vector.shape_cast %87 : vector<8x1xi1> to vector<8x1xi1>
    %100 = vector.broadcast %99 : vector<8x1xi1> to vector<8x64xi1>
    %101 = arith.select %100, %82, %58 : vector<8x64xi1>, vector<8x64xf32>
    %c2_i32 = arith.constant 2 : i32
    %102 = arith.index_cast %c2_i32 : i32 to index
    %c0_32 = arith.constant 0 : index
    %c0_33 = arith.constant 0 : index
    %103 = vector.load %arg1[%102, %c0_32, %c0_33] : memref<4x8x64xf32, #tpu.memory_space<vmem>>, vector<1x8x64xf32>
    %104 = vector.shape_cast %103 : vector<1x8x64xf32> to vector<8x64xf32>
    %cst_34 = arith.constant dense<0.000000e+00> : vector<8x256xf32>
    %105 = tpu.matmul %104, %3, %cst_34 {dimension_numbers = #tpu.dot_dimension_numbers<[1], [0], [0], [1], [0, 0, 1, 1], [], []>} : vector<8x64xf32>, vector<64x256xf32>, vector<8x256xf32> -> vector<8x256xf32>
    %106 = vector.broadcast %5 : vector<1x256xf32> to vector<8x256xf32>
    %107 = arith.addf %105, %106 : vector<8x256xf32>
    %cst_35 = arith.constant dense<0.000000e+00> : vector<8x256xf32>
    %108 = tpu.matmul %98, %4, %cst_35 {dimension_numbers = #tpu.dot_dimension_numbers<[1], [0], [0], [1], [0, 0, 1, 1], [], []>} : vector<8x64xf32>, vector<64x256xf32>, vector<8x256xf32> -> vector<8x256xf32>
    %109 = arith.addf %107, %108 : vector<8x256xf32>
    %cst_36 = arith.constant 5.000000e-01 : f32
    %110 = vector.broadcast %cst_36 : f32 to vector<8x256xf32>
    %111 = arith.mulf %110, %109 : vector<8x256xf32>
    %112 = arith.select %13, %109, %111 : vector<8x256xi1>, vector<8x256xf32>
    %113 = math.tanh %112 : vector<8x256xf32>
    %cst_37 = arith.constant 5.000000e-01 : f32
    %114 = vector.broadcast %cst_37 : f32 to vector<8x256xf32>
    %115 = arith.mulf %114, %113 : vector<8x256xf32>
    %cst_38 = arith.constant 5.000000e-01 : f32
    %116 = vector.broadcast %cst_38 : f32 to vector<8x256xf32>
    %117 = arith.addf %116, %115 : vector<8x256xf32>
    %118 = arith.select %13, %113, %117 : vector<8x256xi1>, vector<8x256xf32>
    %119 = vector.extract_strided_slice %118 {offsets = [0, 0], sizes = [8, 64], strides = [1, 1]} : vector<8x256xf32> to vector<8x64xf32>
    %120 = vector.extract_strided_slice %118 {offsets = [0, 64], sizes = [8, 64], strides = [1, 1]} : vector<8x256xf32> to vector<8x64xf32>
    %121 = vector.extract_strided_slice %118 {offsets = [0, 128], sizes = [8, 64], strides = [1, 1]} : vector<8x256xf32> to vector<8x64xf32>
    %122 = vector.extract_strided_slice %118 {offsets = [0, 192], sizes = [8, 64], strides = [1, 1]} : vector<8x256xf32> to vector<8x64xf32>
    %123 = arith.mulf %120, %101 : vector<8x64xf32>
    %124 = arith.mulf %119, %121 : vector<8x64xf32>
    %125 = arith.addf %123, %124 : vector<8x64xf32>
    %126 = math.tanh %125 : vector<8x64xf32>
    %127 = arith.mulf %122, %126 : vector<8x64xf32>
    %128 = arith.addi %7, %c2_i32 : i32
    %129 = vector.broadcast %128 : i32 to vector<8x1xi32>
    %130 = arith.cmpi slt, %129, %6 : vector<8x1xi32>
    %cst_39 = arith.constant 0.000000e+00 : f32
    %131 = vector.shape_cast %130 : vector<8x1xi1> to vector<8x1xi1>
    %132 = vector.broadcast %131 : vector<8x1xi1> to vector<8x64xi1>
    %133 = vector.broadcast %cst_39 : f32 to vector<8x64xf32>
    %134 = arith.select %132, %127, %133 : vector<8x64xi1>, vector<8x64xf32>
    %135 = arith.index_cast %c2_i32 : i32 to index
    %c0_40 = arith.constant 0 : index
    %c0_41 = arith.constant 0 : index
    %136 = vector.load %arg6[%135, %c0_40, %c0_41] : memref<4x8x64xf32, #tpu.memory_space<vmem>>, vector<1x8x64xf32>
    %137 = vector.shape_cast %136 : vector<1x8x64xf32> to vector<8x64xf32>
    %138 = vector.shape_cast %134 : vector<8x64xf32> to vector<1x8x64xf32>
    tpu.vector_store %arg6[%135, %c0_40, %c0_41], %138 {strides = array<i32>} : memref<4x8x64xf32, #tpu.memory_space<vmem>>, vector<1x8x64xf32>,
    %139 = vector.shape_cast %130 : vector<8x1xi1> to vector<8x1xi1>
    %140 = vector.broadcast %139 : vector<8x1xi1> to vector<8x64xi1>
    %141 = arith.select %140, %127, %98 : vector<8x64xi1>, vector<8x64xf32>
    %142 = vector.shape_cast %130 : vector<8x1xi1> to vector<8x1xi1>
    %143 = vector.broadcast %142 : vector<8x1xi1> to vector<8x64xi1>
    %144 = arith.select %143, %125, %101 : vector<8x64xi1>, vector<8x64xf32>
    %c3_i32 = arith.constant 3 : i32
    %145 = arith.index_cast %c3_i32 : i32 to index
    %c0_42 = arith.constant 0 : index
    %c0_43 = arith.constant 0 : index
    %146 = vector.load %arg1[%145, %c0_42, %c0_43] : memref<4x8x64xf32, #tpu.memory_space<vmem>>, vector<1x8x64xf32>
    %147 = vector.shape_cast %146 : vector<1x8x64xf32> to vector<8x64xf32>
    %cst_44 = arith.constant dense<0.000000e+00> : vector<8x256xf32>
    %148 = tpu.matmul %147, %3, %cst_44 {dimension_numbers = #tpu.dot_dimension_numbers<[1], [0], [0], [1], [0, 0, 1, 1], [], []>} : vector<8x64xf32>, vector<64x256xf32>, vector<8x256xf32> -> vector<8x256xf32>
    %149 = vector.broadcast %5 : vector<1x256xf32> to vector<8x256xf32>
    %150 = arith.addf %148, %149 : vector<8x256xf32>
    %cst_45 = arith.constant dense<0.000000e+00> : vector<8x256xf32>
    %151 = tpu.matmul %141, %4, %cst_45 {dimension_numbers = #tpu.dot_dimension_numbers<[1], [0], [0], [1], [0, 0, 1, 1], [], []>} : vector<8x64xf32>, vector<64x256xf32>, vector<8x256xf32> -> vector<8x256xf32>
    %152 = arith.addf %150, %151 : vector<8x256xf32>
    %cst_46 = arith.constant 5.000000e-01 : f32
    %153 = vector.broadcast %cst_46 : f32 to vector<8x256xf32>
    %154 = arith.mulf %153, %152 : vector<8x256xf32>
    %155 = arith.select %13, %152, %154 : vector<8x256xi1>, vector<8x256xf32>
    %156 = math.tanh %155 : vector<8x256xf32>
    %cst_47 = arith.constant 5.000000e-01 : f32
    %157 = vector.broadcast %cst_47 : f32 to vector<8x256xf32>
    %158 = arith.mulf %157, %156 : vector<8x256xf32>
    %cst_48 = arith.constant 5.000000e-01 : f32
    %159 = vector.broadcast %cst_48 : f32 to vector<8x256xf32>
    %160 = arith.addf %159, %158 : vector<8x256xf32>
    %161 = arith.select %13, %156, %160 : vector<8x256xi1>, vector<8x256xf32>
    %162 = vector.extract_strided_slice %161 {offsets = [0, 0], sizes = [8, 64], strides = [1, 1]} : vector<8x256xf32> to vector<8x64xf32>
    %163 = vector.extract_strided_slice %161 {offsets = [0, 64], sizes = [8, 64], strides = [1, 1]} : vector<8x256xf32> to vector<8x64xf32>
    %164 = vector.extract_strided_slice %161 {offsets = [0, 128], sizes = [8, 64], strides = [1, 1]} : vector<8x256xf32> to vector<8x64xf32>
    %165 = vector.extract_strided_slice %161 {offsets = [0, 192], sizes = [8, 64], strides = [1, 1]} : vector<8x256xf32> to vector<8x64xf32>
    %166 = arith.mulf %163, %144 : vector<8x64xf32>
    %167 = arith.mulf %162, %164 : vector<8x64xf32>
    %168 = arith.addf %166, %167 : vector<8x64xf32>
    %169 = math.tanh %168 : vector<8x64xf32>
    %170 = arith.mulf %165, %169 : vector<8x64xf32>
    %171 = arith.addi %7, %c3_i32 : i32
    %172 = vector.broadcast %171 : i32 to vector<8x1xi32>
    %173 = arith.cmpi slt, %172, %6 : vector<8x1xi32>
    %cst_49 = arith.constant 0.000000e+00 : f32
    %174 = vector.shape_cast %173 : vector<8x1xi1> to vector<8x1xi1>
    %175 = vector.broadcast %174 : vector<8x1xi1> to vector<8x64xi1>
    %176 = vector.broadcast %cst_49 : f32 to vector<8x64xf32>
    %177 = arith.select %175, %170, %176 : vector<8x64xi1>, vector<8x64xf32>
    %178 = arith.index_cast %c3_i32 : i32 to index
    %c0_50 = arith.constant 0 : index
    %c0_51 = arith.constant 0 : index
    %179 = vector.load %arg6[%178, %c0_50, %c0_51] : memref<4x8x64xf32, #tpu.memory_space<vmem>>, vector<1x8x64xf32>
    %180 = vector.shape_cast %179 : vector<1x8x64xf32> to vector<8x64xf32>
    %181 = vector.shape_cast %177 : vector<8x64xf32> to vector<1x8x64xf32>
    tpu.vector_store %arg6[%178, %c0_50, %c0_51], %181 {strides = array<i32>} : memref<4x8x64xf32, #tpu.memory_space<vmem>>, vector<1x8x64xf32>,
    %182 = vector.shape_cast %173 : vector<8x1xi1> to vector<8x1xi1>
    %183 = vector.broadcast %182 : vector<8x1xi1> to vector<8x64xi1>
    %184 = arith.select %183, %170, %141 : vector<8x64xi1>, vector<8x64xf32>
    %185 = vector.shape_cast %173 : vector<8x1xi1> to vector<8x1xi1>
    %186 = vector.broadcast %185 : vector<8x1xi1> to vector<8x64xi1>
    %187 = arith.select %186, %168, %144 : vector<8x64xi1>, vector<8x64xf32>
    %c4_i32_52 = arith.constant 4 : i32
    %c0_53 = arith.constant 0 : index
    %c0_54 = arith.constant 0 : index
    %188 = vector.load %arg7[%c0_53, %c0_54] : memref<8x64xf32, #tpu.memory_space<vmem>>, vector<8x64xf32>
    tpu.vector_store %arg7[%c0_53, %c0_54], %184 {strides = array<i32>} : memref<8x64xf32, #tpu.memory_space<vmem>>, vector<8x64xf32>,
    %c0_55 = arith.constant 0 : index
    %c0_56 = arith.constant 0 : index
    %189 = vector.load %arg8[%c0_55, %c0_56] : memref<8x64xf32, #tpu.memory_space<vmem>>, vector<8x64xf32>
    tpu.vector_store %arg8[%c0_55, %c0_56], %187 {strides = array<i32>} : memref<8x64xf32, #tpu.memory_space<vmem>>, vector<8x64xf32>,
    return
  }
  func.func @transform_0(%arg0: i32) -> (i32, i32, i32) {
    %c0_i32 = arith.constant 0 : i32
    %c0_i32_0 = arith.constant 0 : i32
    %c0_i32_1 = arith.constant 0 : i32
    return %arg0, %c0_i32, %c0_i32_0 : i32, i32, i32
  }
  func.func @transform_1(%arg0: i32) -> (i32, i32) {
    %c0_i32 = arith.constant 0 : i32
    %c0_i32_0 = arith.constant 0 : i32
    %c0_i32_1 = arith.constant 0 : i32
    return %c0_i32, %c0_i32_0 : i32, i32
  }
  func.func @transform_2(%arg0: i32) -> (i32, i32) {
    %c0_i32 = arith.constant 0 : i32
    %c0_i32_0 = arith.constant 0 : i32
    %c0_i32_1 = arith.constant 0 : i32
    return %c0_i32, %c0_i32_0 : i32, i32
  }
  func.func @transform_3(%arg0: i32) -> (i32, i32) {
    %c0_i32 = arith.constant 0 : i32
    %c0_i32_0 = arith.constant 0 : i32
    %c0_i32_1 = arith.constant 0 : i32
    return %c0_i32, %c0_i32_0 : i32, i32
  }
  func.func @transform_4(%arg0: i32) -> (i32, i32) {
    %c0_i32 = arith.constant 0 : i32
    %c0_i32_0 = arith.constant 0 : i32
    %c0_i32_1 = arith.constant 0 : i32
    return %c0_i32, %c0_i32_0 : i32, i32
  }
  func.func @transform_5(%arg0: i32) -> (i32, i32, i32) {
    %c0_i32 = arith.constant 0 : i32
    %c0_i32_0 = arith.constant 0 : i32
    %c0_i32_1 = arith.constant 0 : i32
    return %arg0, %c0_i32, %c0_i32_0 : i32, i32, i32
  }
}

</mosaic_0001>

<llo_original>
// kernel: hoare_lstm_forward.1
$region0: #{hoare_lstm_forward.1}
  #allocation0 [shape = 'u32[]', space=smem, size = 0x4, offset = 0x4, fixed_abs, tag = 'smem constant byte address 0x4 - core index']
  #allocation1 [shape = 'u32[72,128]{1,0:T(1,128)}', space=vmem, size = 0x9000, scoped, tag = 'internal scratch']
  #allocation2 [shape = 'f32[8,64]{1,0:T(8,128)}', space=vmem, size = 0x1000, scoped, tag = 'scratch operand']
  #allocation3 [shape = 'f32[8,64]{1,0:T(8,128)}', space=vmem, size = 0x1000, scoped, tag = 'scratch operand']
  %s0 = inlined_call_operand.vmem [shape: f32[8,8,64], index: 0, kind: input, shape index: {}]
  %s1 = inlined_call_operand.vmem [shape: s32[8,1], index: 1, kind: input, shape index: {}]
  %s2 = inlined_call_operand.vmem [shape: f32[64,256], index: 2, kind: input, shape index: {}]
  %s3 = inlined_call_operand.hbm [shape: f32[64,256], index: 3, kind: input, shape index: {}]
  %s4 = inlined_call_operand.vmem [shape: f32[1,256], index: 4, kind: input, shape index: {}]
  %s5 = inlined_call_operand.vmem [shape: f32[8,8,64], index: 5, kind: output, shape index: {}]
  %s6 = sld [smem:[#allocation0]]
  $region61: #{hoare_lstm_forward.1} parent=0
    _
  %s8 = ssub.s32 1, %s6
  %s9 = scalar_select 0, %s8, %s6
  $region1: #{hoare_lstm_forward.1} parent=0
    #allocation4 [shape = 'u8[65536]{0}', space=vmem, size = 0x10000, scoped, tag = 'input window, operand 3, single buffered']
    #allocation5 [shape = 's32[2]{0}', space=sflag, size = 0x8, scoped, tag = 'scoped memory for hoare_lstm_forward.1']
    %10 = vsyncpa [#allocation5], 0
    loop: start=0, step=1, limit=4
    $region2: #{hoare_lstm_forward.1} parent=1 // loop_pre_header
      _
    $region3: #{hoare_lstm_forward.1} parent=1 // loop_header
      %s12 = sphi 0, %s16
      %p13 = scmp.ge.s32.totalorder %s12, 4
      %s22 = sphi 0, %s24
      %s25 = sphi 0, %s22
      %s26 = sphi 0, %s25
      %s42 = sphi 0, %s26
      %s46 = sphi 0, %s46
      %s48 = sphi 0, %s46
      %s49 = sphi 0, %s48
      %s63 = sphi 0, %s49
      %s67 = sphi 0, %s67
      %s69 = sphi 0, %s67
      %s70 = sphi 0, %s69
      %s84 = sphi 0, %s70
      %s88 = sphi 0, %s88
      %s90 = sphi 0, %s88
      %s91 = sphi 0, %s90
      %s105 = sphi 0, %s91
      %s109 = sphi 0, %s109
      %s111 = sphi 0, %s109
      %s112 = sphi 0, %s111
      %s126 = sphi 0, %s112
      %s132 = sphi 0, %s134
      %s135 = sphi 0, %s132
      %s136 = sphi 0, %s135
      %s152 = sphi 0, %s136
    $region4: #{hoare_lstm_forward.1} parent=1 // loop_header_branch
      %15 = sbr.rel (%p13) target = $region8
    $region5: #{hoare_lstm_forward.1} parent=1 // loop_body
      %s17 = ssub.s32 %s12, 1
      %s18 = ssub.s32 %s12, 2
      %s19 = sadd.s32 %s12, 1
      %s20 = ssub.s32 %s12, %s19
      %p21 = scmp.eq.s32.totalorder %s20, 0
      %s23 = sadd.s32 %s22, 1
      %s24 = scalar_select %p21, %s22, %s23
      %p27 = pneg %p21
      %p28 = scmp.eq.s32.totalorder %s12, 1
      %p29 = por %p27, %p28
      %p30 = scmp.ne.s32.totalorder %s22, %s25
      %p31 = scmp.eq.s32.totalorder %s12, 0
      %p32 = por %p30, %p31
      %p33 = scmp.ne.s32.totalorder %s22, %s25
      %p34 = scmp.eq.s32.totalorder %s17, 1
      %p35 = por %p33, %p34
      %p36 = scmp.ne.s32.totalorder %s25, %s26
      %p37 = scmp.eq.s32.totalorder %s17, 0
      %p38 = por %p36, %p37
      %p39 = scmp.ne.s32.totalorder %s25, %s26
      %p40 = scmp.eq.s32.totalorder %s18, 1
      %p41 = por %p39, %p40
      %p43 = scmp.ne.s32.totalorder %s26, %s42
      %p44 = scmp.eq.s32.totalorder %s18, 0
      %p45 = por %p43, %p44
      %s47 = sadd.s32 %s46, 1
      %p50 = scmp.eq.s32.totalorder %s12, 1
      %p51 = scmp.ne.s32.totalorder %s46, %s48
      %p52 = scmp.eq.s32.totalorder %s12, 0
      %p53 = por %p51, %p52
      %p54 = scmp.ne.s32.totalorder %s46, %s48
      %p55 = scmp.eq.s32.totalorder %s17, 1
      %p56 = por %p54, %p55
      %p57 = scmp.ne.s32.totalorder %s48, %s49
      %p58 = scmp.eq.s32.totalorder %s17, 0
      %p59 = por %p57, %p58
      %p60 = scmp.ne.s32.totalorder %s48, %s49
      %p61 = scmp.eq.s32.totalorder %s18, 1
      %p62 = por %p60, %p61
      %p64 = scmp.ne.s32.totalorder %s49, %s63
      %p65 = scmp.eq.s32.totalorder %s18, 0
      %p66 = por %p64, %p65
      %s68 = sadd.s32 %s67, 1
      %p71 = scmp.eq.s32.totalorder %s12, 1
      %p72 = scmp.ne.s32.totalorder %s67, %s69
      %p73 = scmp.eq.s32.totalorder %s12, 0
      %p74 = por %p72, %p73
      %p75 = scmp.ne.s32.totalorder %s67, %s69
      %p76 = scmp.eq.s32.totalorder %s17, 1
      %p77 = por %p75, %p76
      %p78 = scmp.ne.s32.totalorder %s69, %s70
      %p79 = scmp.eq.s32.totalorder %s17, 0
      %p80 = por %p78, %p79
      %p81 = scmp.ne.s32.totalorder %s69, %s70
      %p82 = scmp.eq.s32.totalorder %s18, 1
      %p83 = por %p81, %p82
      %p85 = scmp.ne.s32.totalorder %s70, %s84
      %p86 = scmp.eq.s32.totalorder %s18, 0
      %p87 = por %p85, %p86
      %s89 = sadd.s32 %s88, 1
      %p92 = scmp.eq.s32.totalorder %s12, 1
      %p93 = scmp.ne.s32.totalorder %s88, %s90
      %p94 = scmp.eq.s32.totalorder %s12, 0
      %p95 = por %p93, %p94
      %p96 = scmp.ne.s32.totalorder %s88, %s90
      %p97 = scmp.eq.s32.totalorder %s17, 1
      %p98 = por %p96, %p97
      %p99 = scmp.ne.s32.totalorder %s90, %s91
      %p100 = scmp.eq.s32.totalorder %s17, 0
      %p101 = por %p99, %p100
      %p102 = scmp.ne.s32.totalorder %s90, %s91
      %p103 = scmp.eq.s32.totalorder %s18, 1
      %p104 = por %p102, %p103
      %p106 = scmp.ne.s32.totalorder %s91, %s105
      %p107 = scmp.eq.s32.totalorder %s18, 0
      %p108 = por %p106, %p107
      %s110 = sadd.s32 %s109, 1
      %p113 = scmp.eq.s32.totalorder %s12, 1
      %p114 = scmp.ne.s32.totalorder %s109, %s111
      %p115 = scmp.eq.s32.totalorder %s12, 0
      %p116 = por %p114, %p115
      %p117 = scmp.ne.s32.totalorder %s109, %s111
      %p118 = scmp.eq.s32.totalorder %s17, 1
      %p119 = por %p117, %p118
      %p120 = scmp.ne.s32.totalorder %s111, %s112
      %p121 = scmp.eq.s32.totalorder %s17, 0
      %p122 = por %p120, %p121
      %p123 = scmp.ne.s32.totalorder %s111, %s112
      %p124 = scmp.eq.s32.totalorder %s18, 1
      %p125 = por %p123, %p124
      %p127 = scmp.ne.s32.totalorder %s112, %s126
      %p128 = scmp.eq.s32.totalorder %s18, 0
      %p129 = por %p127, %p128
      %s130 = ssub.s32 %s12, %s19
      %p131 = scmp.eq.s32.totalorder %s130, 0
      %s133 = sadd.s32 %s132, 1
      %s134 = scalar_select %p131, %s132, %s133
      %p137 = pneg %p131
      %p138 = scmp.eq.s32.totalorder %s12, 1
      %p139 = por %p137, %p138
      %p140 = scmp.ne.s32.totalorder %s132, %s135
      %p141 = scmp.eq.s32.totalorder %s12, 0
      %p142 = por %p140, %p141
      %p143 = scmp.ne.s32.totalorder %s132, %s135
      %p144 = scmp.eq.s32.totalorder %s17, 1
      %p145 = por %p143, %p144
      %p146 = scmp.ne.s32.totalorder %s135, %s136
      %p147 = scmp.eq.s32.totalorder %s17, 0
      %p148 = por %p146, %p147
      %p149 = scmp.ne.s32.totalorder %s135, %s136
      %p150 = scmp.eq.s32.totalorder %s18, 1
      %p151 = por %p149, %p150
      %p153 = scmp.ne.s32.totalorder %s136, %s152
      %p154 = scmp.eq.s32.totalorder %s18, 0
      %p155 = por %p153, %p154
      %p156 = scmp.le.s32.totalorder 1, %s12
      %p157 = scmp.lt.s32.totalorder %s12, 3
      %p158 = pnand %p156, %p157
      %p159 = pneg %p158
      // Predicated region
      $region9: #{hoare_lstm_forward.1} parent=5 // pred_check
        _
      $region10: #{hoare_lstm_forward.1} parent=5 // pred_check_branch
        %161 = sbr.rel (%p158) target = $region12
      $region11: #{hoare_lstm_forward.1} parent=5 // pred_region
        %s162 = ssub.s32 %s12, 1
        // Predicated region
        $region13: #{hoare_lstm_forward.1} parent=11 // pred_check
          %p163 = pneg %p59
        $region14: #{hoare_lstm_forward.1} parent=11 // pred_check_branch
          %165 = sbr.rel (%p163) target = $region16
        $region15: #{hoare_lstm_forward.1} parent=11 // pred_region
          _
        $region16: #{hoare_lstm_forward.1} parent=11 // pred_fallthru
          _
        // Predicated region
        $region17: #{hoare_lstm_forward.1} parent=11 // pred_check
          %p166 = pneg %p80
        $region18: #{hoare_lstm_forward.1} parent=11 // pred_check_branch
          %168 = sbr.rel (%p166) target = $region20
        $region19: #{hoare_lstm_forward.1} parent=11 // pred_region
          _
        $region20: #{hoare_lstm_forward.1} parent=11 // pred_fallthru
          _
        // Predicated region
        $region21: #{hoare_lstm_forward.1} parent=11 // pred_check
          %p169 = pneg %p101
        $region22: #{hoare_lstm_forward.1} parent=11 // pred_check_branch
          %171 = sbr.rel (%p169) target = $region24
        $region23: #{hoare_lstm_forward.1} parent=11 // pred_region
          %173 = vsyncadd [#allocation5], 0
          %s174 = sshll.u32 %s3, 4
          %s175 = int_to_ptr.hbm [resolvable:$true] %s174
          %s176 = sshll.u32 [#allocation4], 4
          %s177 = int_to_ptr.vmem [resolvable:$true] %s176
          %182 = dma.hbm_to_vmem [thread:$0]  %s175, 2048, %s177, [#allocation5], 256, 256, 16
        $region24: #{hoare_lstm_forward.1} parent=11 // pred_fallthru
          _
        // Predicated region
        $region25: #{hoare_lstm_forward.1} parent=11 // pred_check
          %p183 = pneg %p122
        $region26: #{hoare_lstm_forward.1} parent=11 // pred_check_branch
          %185 = sbr.rel (%p183) target = $region28
        $region27: #{hoare_lstm_forward.1} parent=11 // pred_region
          _
        $region28: #{hoare_lstm_forward.1} parent=11 // pred_fallthru
          _
      $region12: #{hoare_lstm_forward.1} parent=5 // pred_fallthru
        _
      %p186 = scmp.lt.s32.totalorder %s12, 2
      // Predicated region
      $region29: #{hoare_lstm_forward.1} parent=5 // pred_check
        %p187 = pneg %p186
      $region30: #{hoare_lstm_forward.1} parent=5 // pred_check_branch
        %189 = sbr.rel (%p187) target = $region32
      $region31: #{hoare_lstm_forward.1} parent=5 // pred_region
        // Predicated region
        $region33: #{hoare_lstm_forward.1} parent=31 // pred_check
          %p190 = pneg %p32
        $region34: #{hoare_lstm_forward.1} parent=31 // pred_check_branch
          %192 = sbr.rel (%p190) target = $region36
        $region35: #{hoare_lstm_forward.1} parent=31 // pred_region
          %s193 = smul.u32 4, %s12
          %p194 = scmp.lt.s32.totalorder %s193, 7
          %s195 = scalar_select %p194, %s193, 7
          %s196 = smul.addr %s195, 8
          %s197 = scalar_lea.vmem %s0, %s196
          %s198 = smul.u32 4, %s12
        $region36: #{hoare_lstm_forward.1} parent=31 // pred_fallthru
          _
      $region32: #{hoare_lstm_forward.1} parent=5 // pred_fallthru
        _
      %p199 = scmp.le.s32.totalorder 1, %s12
      %p200 = scmp.lt.s32.totalorder %s12, 3
      %p201 = pnand %p199, %p200
      %p202 = pneg %p201
      // Predicated region
      $region37: #{hoare_lstm_forward.1} parent=5 // pred_check
        _
      $region38: #{hoare_lstm_forward.1} parent=5 // pred_check_branch
        %204 = sbr.rel (%p201) target = $region40
      $region39: #{hoare_lstm_forward.1} parent=5 // pred_region
        %s205 = ssub.s32 %s12, 1
        // Predicated region
        $region41: #{hoare_lstm_forward.1} parent=39 // pred_check
          %p206 = pneg %p101
        $region42: #{hoare_lstm_forward.1} parent=39 // pred_check_branch
          %208 = sbr.rel (%p206) target = $region44
        $region43: #{hoare_lstm_forward.1} parent=39 // pred_region
          %210 = dma.done [#allocation5], 2048
        $region44: #{hoare_lstm_forward.1} parent=39 // pred_fallthru
          _
        %s211 = smul.u32 4, %s17
        %p212 = scmp.lt.s32.totalorder %s211, 7
        %s213 = scalar_select %p212, %s211, 7
        %s214 = smul.addr %s213, 8
        %s215 = scalar_lea.vmem %s0, %s214
        %p216 = pneg %p38
        %p217 = pneg %p35
        %p218 = pneg %p59
        %p219 = pneg %p56
        %p220 = pneg %p80
        %p221 = pneg %p77
        %p222 = pneg %p101
        %p223 = pneg %p98
        %p224 = pneg %p122
        %p225 = pneg %p119
        %p226 = pneg %p148
        %p227 = pneg %p145
        %s228 = smul.u32 4, %s17
        %p229 = scmp.lt.s32.totalorder %s228, 7
        %s230 = scalar_select %p229, %s228, 7
        %s231 = smul.addr %s230, 8
        %s232 = scalar_lea.vmem %s5, %s231
        %s233 = smul.u32 4, %s17
        %p234 = scmp.lt.s32.totalorder %s233, 7
        %s235 = scalar_select %p234, %s233, 7
        %s236 = smul.addr %s235, 8
        %s237 = scalar_lea.vmem %s0, %s236
        %s238 = smul.u32 4, %s17
        %s239 = smul.u32 4, %s17
        %p240 = scmp.lt.s32.totalorder %s239, 7
        %s241 = scalar_select %p240, %s239, 7
        %s242 = smul.addr %s241, 8
        %s243 = scalar_lea.vmem %s5, %s242
        %s244 = smul.u32 4, %s17
        %p245 = scmp.eq.s32.totalorder %s17, 0
        // Predicated region
        $region45: #{hoare_lstm_forward.1} parent=39 // pred_check
          %p246 = pneg %p245
        $region46: #{hoare_lstm_forward.1} parent=39 // pred_check_branch
          %248 = sbr.rel (%p246) target = $region48
        $region47: #{hoare_lstm_forward.1} parent=39 // pred_region
          %vm249 = vcmask 523264
          %250 = vst.msk [vmem:[#allocation2] sm:$0xff] %vm249, 0.0
          %251 = vst.msk [vmem:[#allocation3] sm:$0xff] %vm249, 0.0
        $region48: #{hoare_lstm_forward.1} parent=39 // pred_fallthru
          _
        %v252 = vld [vmem:[%s2] sm:$0xff]
        %v253 = vld [vmem:[%s2 + $0x8] sm:$0xff]
        %v254 = vld [vmem:[%s2 + $0x10] sm:$0xff]
        %v255 = vld [vmem:[%s2 + $0x18] sm:$0xff]
        %v256 = vld [vmem:[%s2 + $0x20] sm:$0xff]
        %v257 = vld [vmem:[%s2 + $0x28] sm:$0xff]
        %v258 = vld [vmem:[%s2 + $0x30] sm:$0xff]
        %v259 = vld [vmem:[%s2 + $0x38] sm:$0xff]
        %v260 = vld [vmem:[%s2 + $0x40] sm:$0xff]
        %v261 = vld [vmem:[%s2 + $0x48] sm:$0xff]
        %v262 = vld [vmem:[%s2 + $0x50] sm:$0xff]
        %v263 = vld [vmem:[%s2 + $0x58] sm:$0xff]
        %v264 = vld [vmem:[%s2 + $0x60] sm:$0xff]
        %v265 = vld [vmem:[%s2 + $0x68] sm:$0xff]
        %v266 = vld [vmem:[%s2 + $0x70] sm:$0xff]
        %v267 = vld [vmem:[%s2 + $0x78] sm:$0xff]
        %v268 = vld [vmem:[#allocation4] sm:$0xff]
        %v269 = vld [vmem:[#allocation4 + $0x8] sm:$0xff]
        %v270 = vld [vmem:[#allocation4 + $0x10] sm:$0xff]
        %v271 = vld [vmem:[#allocation4 + $0x18] sm:$0xff]
        %v272 = vld [vmem:[#allocation4 + $0x20] sm:$0xff]
        %v273 = vld [vmem:[#allocation4 + $0x28] sm:$0xff]
        %v274 = vld [vmem:[#allocation4 + $0x30] sm:$0xff]
        %v275 = vld [vmem:[#allocation4 + $0x38] sm:$0xff]
        %v276 = vld [vmem:[#allocation4 + $0x40] sm:$0xff]
        %v277 = vld [vmem:[#allocation4 + $0x48] sm:$0xff]
        %v278 = vld [vmem:[#allocation4 + $0x50] sm:$0xff]
        %v279 = vld [vmem:[#allocation4 + $0x58] sm:$0xff]
        %v280 = vld [vmem:[#allocation4 + $0x60] sm:$0xff]
        %v281 = vld [vmem:[#allocation4 + $0x68] sm:$0xff]
        %v282 = vld [vmem:[#allocation4 + $0x70] sm:$0xff]
        %v283 = vld [vmem:[#allocation4 + $0x78] sm:$0xff]
        %v284 = vld [vmem:[%s4] sm:$0x3]
        %v285 = vld [vmem:[%s1] sm:$0xff]
        %s286 = smul.u32 %s17, 4
        %v287 = vlaneseq
        %v288 = vand.u32 %v287, 127
        %v289 = vadd.s32 %v288, 128
        %vm290 = vcmp.ge.s32.totalorder %v288, 128
        %vm291 = vcmp.ge.s32.totalorder %v289, 128
        %vm292 = vcmp.lt.s32.totalorder %v288, 192
        %vm293 = vcmp.lt.s32.totalorder %v289, 192
        %vm294 = vmand %vm290, %vm292
        %vm295 = vmand %vm291, %vm293
        %v296 = vld [vmem:[#allocation2] sm:$0xff]
        %v297 = vld [vmem:[#allocation3] sm:$0xff]
        %v298 = vld [vmem:[%s237] sm:$0xff]
        %v300 = vperm.slane %v284, 0
        %v301 = vperm.slane %v284, 1
        %vm304 = vcmask 523264
        %v306 = vsel %vm304, %v298, 0
        %308 = vmatpush.msra.mxu0 0.0
        %309 = vmatpush.msra.mxu0 0.0
        %310 = vmatpush.msra.mxu0 0.0
        %311 = vmatpush.msra.mxu0 0.0
        %312 = vmatpush.msra.mxu0 0.0
        %313 = vmatpush.msra.mxu0 0.0
        %314 = vmatpush.msra.mxu0 0.0
        %315 = vmatpush.msra.mxu0 0.0
        %316 = vmatpush.msra.mxu0 %v266
        %317 = vmatpush.msra.mxu0 %v264
        %318 = vmatpush.msra.mxu0 %v262
        %319 = vmatpush.msra.mxu0 %v260
        %320 = vmatpush.msra.mxu0 %v258
        %321 = vmatpush.msra.mxu0 %v256
        %322 = vmatpush.msra.mxu0 %v254
        %323 = vmatpush.msra.mxu0 %v252
        %324 = vmatmul.f32.gmra.mxu0 %v306
        %v325 = vpop.f32.mrf.mxu0
        %v326 = vadd.f32 %v300, %v325
        %327 = vdwg.mxu0
        %328 = vmatpush.msra.mxu0 0.0
        %329 = vmatpush.msra.mxu0 0.0
        %330 = vmatpush.msra.mxu0 0.0
        %331 = vmatpush.msra.mxu0 0.0
        %332 = vmatpush.msra.mxu0 0.0
        %333 = vmatpush.msra.mxu0 0.0
        %334 = vmatpush.msra.mxu0 0.0
        %335 = vmatpush.msra.mxu0 0.0
        %336 = vmatpush.msra.mxu0 %v267
        %337 = vmatpush.msra.mxu0 %v265
        %338 = vmatpush.msra.mxu0 %v263
        %339 = vmatpush.msra.mxu0 %v261
        %340 = vmatpush.msra.mxu0 %v259
        %341 = vmatpush.msra.mxu0 %v257
        %342 = vmatpush.msra.mxu0 %v255
        %343 = vmatpush.msra.mxu0 %v253
        %344 = vmatmul.f32.gmra.mxu0 %v306
        %v345 = vpop.f32.mrf.mxu0
        %v346 = vadd.f32 %v301, %v345
        %347 = vdwg.mxu0
        %v349 = vsel %vm304, %v296, 0
        %351 = vmatpush.msra.mxu0 0.0
        %352 = vmatpush.msra.mxu0 0.0
        %353 = vmatpush.msra.mxu0 0.0
        %354 = vmatpush.msra.mxu0 0.0
        %355 = vmatpush.msra.mxu0 0.0
        %356 = vmatpush.msra.mxu0 0.0
        %357 = vmatpush.msra.mxu0 0.0
        %358 = vmatpush.msra.mxu0 0.0
        %359 = vmatpush.msra.mxu0 %v282
        %360 = vmatpush.msra.mxu0 %v280
        %361 = vmatpush.msra.mxu0 %v278
        %362 = vmatpush.msra.mxu0 %v276
        %363 = vmatpush.msra.mxu0 %v274
        %364 = vmatpush.msra.mxu0 %v272
        %365 = vmatpush.msra.mxu0 %v270
        %366 = vmatpush.msra.mxu0 %v268
        %367 = vmatmul.f32.gmra.mxu0 %v349
        %v368 = vpop.f32.mrf.mxu0
        %v369 = vadd.f32 0.0, %v368
        %370 = vdwg.mxu0
        %371 = vmatpush.msra.mxu0 0.0
        %372 = vmatpush.msra.mxu0 0.0
        %373 = vmatpush.msra.mxu0 0.0
        %374 = vmatpush.msra.mxu0 0.0
        %375 = vmatpush.msra.mxu0 0.0
        %376 = vmatpush.msra.mxu0 0.0
        %377 = vmatpush.msra.mxu0 0.0
        %378 = vmatpush.msra.mxu0 0.0
        %379 = vmatpush.msra.mxu0 %v283
        %380 = vmatpush.msra.mxu0 %v281
        %381 = vmatpush.msra.mxu0 %v279
        %382 = vmatpush.msra.mxu0 %v277
        %383 = vmatpush.msra.mxu0 %v275
        %384 = vmatpush.msra.mxu0 %v273
        %385 = vmatpush.msra.mxu0 %v271
        %386 = vmatpush.msra.mxu0 %v269
        %387 = vmatmul.f32.gmra.mxu0 %v349
        %v388 = vpop.f32.mrf.mxu0
        %v389 = vadd.f32 0.0, %v388
        %390 = vdwg.mxu0
        %v391 = vadd.f32 %v326, %v369
        %v392 = vadd.f32 %v346, %v389
        %v393 = vmul.f32 %v391, 0.5
        %v394 = vmul.f32 %v392, 0.5
        %v395 = vsel %vm294, %v391, %v393
        %v396 = vsel %vm295, %v392, %v394
        %v397 = vtanh.pop %v395
        %v398 = vtanh.pop %v396
        %v399 = vmul.f32 %v397, 0.5
        %v400 = vmul.f32 %v398, 0.5
        %v401 = vadd.f32 %v399, 0.5
        %v402 = vadd.f32 %v400, 0.5
        %v403 = vsel %vm294, %v397, %v401
        %v404 = vsel %vm295, %v398, %v402
        %406 = vrot.lane.b32.xlu0 %v297, 64
        %v407 = vpop.permute.xlu0 %406
        %v409 = vmul.f32 %v403, %v407
        %v410 = vmul.f32 %v403, %v404
        %412 = vrot.lane.b32.xlu0 %v410, 64
        %v413 = vpop.permute.xlu0 %412
        %v415 = vadd.f32 %v409, %v413
        %v416 = vtanh.pop %v415
        %v417 = vmul.f32 %v404, %v416
        %v418 = vstv %s286
        %vm419 = vcmp.lt.s32.totalorder %v418, %v285
        %v420 = vsel %vm419, 1, 0
        %421 = vset.pattern.permute.xlu0 0
        %422 = vperm.xlu0 %421, %v420
        %v423 = vpop.permute.xlu0 %422
        %vm424 = vcmp.eq.s32.totalorder %v423, 1
        %v425 = vsel %vm424, %v417, 0.0
        %427 = vrot.lane.b32.xlu0 %v425, 64
        %v428 = vpop.permute.xlu0 %427
        %430 = vst.msk [vmem:[%s243] sm:$0xff] %vm304, %v428
        %431 = vrot.lane.b32.xlu0 %v296, 64
        %v432 = vpop.permute.xlu0 %431
        %v434 = vsel %vm424, %v417, %v432
        %v435 = vsel %vm424, %v415, %v407
        %s436 = scalar_lea.vmem %s237, 8
        %v437 = vld [vmem:[%s436] sm:$0xff]
        %v439 = vsel %vm304, %v437, 0
        %441 = vmatpush.msra.mxu0 0.0
        %442 = vmatpush.msra.mxu0 0.0
        %443 = vmatpush.msra.mxu0 0.0
        %444 = vmatpush.msra.mxu0 0.0
        %445 = vmatpush.msra.mxu0 0.0
        %446 = vmatpush.msra.mxu0 0.0
        %447 = vmatpush.msra.mxu0 0.0
        %448 = vmatpush.msra.mxu0 0.0
        %449 = vmatpush.msra.mxu0 %v266
        %450 = vmatpush.msra.mxu0 %v264
        %451 = vmatpush.msra.mxu0 %v262
        %452 = vmatpush.msra.mxu0 %v260
        %453 = vmatpush.msra.mxu0 %v258
        %454 = vmatpush.msra.mxu0 %v256
        %455 = vmatpush.msra.mxu0 %v254
        %456 = vmatpush.msra.mxu0 %v252
        %457 = vmatmul.f32.gmra.mxu0 %v439
        %v458 = vpop.f32.mrf.mxu0
        %v459 = vadd.f32 %v300, %v458
        %460 = vdwg.mxu0
        %461 = vmatpush.msra.mxu0 0.0
        %462 = vmatpush.msra.mxu0 0.0
        %463 = vmatpush.msra.mxu0 0.0
        %464 = vmatpush.msra.mxu0 0.0
        %465 = vmatpush.msra.mxu0 0.0
        %466 = vmatpush.msra.mxu0 0.0
        %467 = vmatpush.msra.mxu0 0.0
        %468 = vmatpush.msra.mxu0 0.0
        %469 = vmatpush.msra.mxu0 %v267
        %470 = vmatpush.msra.mxu0 %v265
        %471 = vmatpush.msra.mxu0 %v263
        %472 = vmatpush.msra.mxu0 %v261
        %473 = vmatpush.msra.mxu0 %v259
        %474 = vmatpush.msra.mxu0 %v257
        %475 = vmatpush.msra.mxu0 %v255
        %476 = vmatpush.msra.mxu0 %v253
        %477 = vmatmul.f32.gmra.mxu0 %v439
        %v478 = vpop.f32.mrf.mxu0
        %v479 = vadd.f32 %v301, %v478
        %480 = vdwg.mxu0
        %482 = vrot.lane.b32.xlu0 %v434, 64
        %v483 = vpop.permute.xlu0 %482
        %v484 = vsel %vm304, %v483, 0
        %486 = vmatpush.msra.mxu0 0.0
        %487 = vmatpush.msra.mxu0 0.0
        %488 = vmatpush.msra.mxu0 0.0
        %489 = vmatpush.msra.mxu0 0.0
        %490 = vmatpush.msra.mxu0 0.0
        %491 = vmatpush.msra.mxu0 0.0
        %492 = vmatpush.msra.mxu0 0.0
        %493 = vmatpush.msra.mxu0 0.0
        %494 = vmatpush.msra.mxu0 %v282
        %495 = vmatpush.msra.mxu0 %v280
        %496 = vmatpush.msra.mxu0 %v278
        %497 = vmatpush.msra.mxu0 %v276
        %498 = vmatpush.msra.mxu0 %v274
        %499 = vmatpush.msra.mxu0 %v272
        %500 = vmatpush.msra.mxu0 %v270
        %501 = vmatpush.msra.mxu0 %v268
        %502 = vmatmul.f32.gmra.mxu0 %v484
        %v503 = vpop.f32.mrf.mxu0
        %v504 = vadd.f32 0.0, %v503
        %505 = vdwg.mxu0
        %506 = vmatpush.msra.mxu0 0.0
        %507 = vmatpush.msra.mxu0 0.0
        %508 = vmatpush.msra.mxu0 0.0
        %509 = vmatpush.msra.mxu0 0.0
        %510 = vmatpush.msra.mxu0 0.0
        %511 = vmatpush.msra.mxu0 0.0
        %512 = vmatpush.msra.mxu0 0.0
        %513 = vmatpush.msra.mxu0 0.0
        %514 = vmatpush.msra.mxu0 %v283
        %515 = vmatpush.msra.mxu0 %v281
        %516 = vmatpush.msra.mxu0 %v279
        %517 = vmatpush.msra.mxu0 %v277
        %518 = vmatpush.msra.mxu0 %v275
        %519 = vmatpush.msra.mxu0 %v273
        %520 = vmatpush.msra.mxu0 %v271
        %521 = vmatpush.msra.mxu0 %v269
        %522 = vmatmul.f32.gmra.mxu0 %v484
        %v523 = vpop.f32.mrf.mxu0
        %v524 = vadd.f32 0.0, %v523
        %525 = vdwg.mxu0
        %v526 = vadd.f32 %v459, %v504
        %v527 = vadd.f32 %v479, %v524
        %v528 = vmul.f32 %v526, 0.5
        %v529 = vmul.f32 %v527, 0.5
        %v530 = vsel %vm294, %v526, %v528
        %v531 = vsel %vm295, %v527, %v529
        %v532 = vtanh.pop %v530
        %v533 = vtanh.pop %v531
        %v534 = vmul.f32 %v532, 0.5
        %v535 = vmul.f32 %v533, 0.5
        %v536 = vadd.f32 %v534, 0.5
        %v537 = vadd.f32 %v535, 0.5
        %v538 = vsel %vm294, %v532, %v536
        %v539 = vsel %vm295, %v533, %v537
        %v540 = vmul.f32 %v538, %v435
        %v541 = vmul.f32 %v538, %v539
        %543 = vrot.lane.b32.xlu0 %v541, 64
        %v544 = vpop.permute.xlu0 %543
        %v546 = vadd.f32 %v540, %v544
        %v547 = vtanh.pop %v546
        %v548 = vmul.f32 %v539, %v547
        %s549 = sadd.s32 %s286, 1
        %v550 = vstv %s549
        %vm551 = vcmp.lt.s32.totalorder %v550, %v285
        %v552 = vsel %vm551, 1, 0
        %553 = vset.pattern.permute.xlu0 0
        %554 = vperm.xlu0 %553, %v552
        %v555 = vpop.permute.xlu0 %554
        %vm556 = vcmp.eq.s32.totalorder %v555, 1
        %v557 = vsel %vm556, %v548, 0.0
        %559 = vrot.lane.b32.xlu0 %v557, 64
        %v560 = vpop.permute.xlu0 %559
        %s562 = scalar_lea.vmem %s243, 8
        %563 = vst.msk [vmem:[%s562] sm:$0xff] %vm304, %v560
        %v564 = vsel %vm556, %v548, %v434
        %v565 = vsel %vm556, %v546, %v435
        %s566 = scalar_lea.vmem %s237, 16
        %v567 = vld [vmem:[%s566] sm:$0xff]
        %v569 = vsel %vm304, %v567, 0
        %571 = vmatpush.msra.mxu0 0.0
        %572 = vmatpush.msra.mxu0 0.0
        %573 = vmatpush.msra.mxu0 0.0
        %574 = vmatpush.msra.mxu0 0.0
        %575 = vmatpush.msra.mxu0 0.0
        %576 = vmatpush.msra.mxu0 0.0
        %577 = vmatpush.msra.mxu0 0.0
        %578 = vmatpush.msra.mxu0 0.0
        %579 = vmatpush.msra.mxu0 %v266
        %580 = vmatpush.msra.mxu0 %v264
        %581 = vmatpush.msra.mxu0 %v262
        %582 = vmatpush.msra.mxu0 %v260
        %583 = vmatpush.msra.mxu0 %v258
        %584 = vmatpush.msra.mxu0 %v256
        %585 = vmatpush.msra.mxu0 %v254
        %586 = vmatpush.msra.mxu0 %v252
        %587 = vmatmul.f32.gmra.mxu0 %v569
        %v588 = vpop.f32.mrf.mxu0
        %v589 = vadd.f32 %v300, %v588
        %590 = vdwg.mxu0
        %591 = vmatpush.msra.mxu0 0.0
        %592 = vmatpush.msra.mxu0 0.0
        %593 = vmatpush.msra.mxu0 0.0
        %594 = vmatpush.msra.mxu0 0.0
        %595 = vmatpush.msra.mxu0 0.0
        %596 = vmatpush.msra.mxu0 0.0
        %597 = vmatpush.msra.mxu0 0.0
        %598 = vmatpush.msra.mxu0 0.0
        %599 = vmatpush.msra.mxu0 %v267
        %600 = vmatpush.msra.mxu0 %v265
        %601 = vmatpush.msra.mxu0 %v263
        %602 = vmatpush.msra.mxu0 %v261
        %603 = vmatpush.msra.mxu0 %v259
        %604 = vmatpush.msra.mxu0 %v257
        %605 = vmatpush.msra.mxu0 %v255
        %606 = vmatpush.msra.mxu0 %v253
        %607 = vmatmul.f32.gmra.mxu0 %v569
        %v608 = vpop.f32.mrf.mxu0
        %v609 = vadd.f32 %v301, %v608
        %610 = vdwg.mxu0
        %612 = vrot.lane.b32.xlu0 %v564, 64
        %v613 = vpop.permute.xlu0 %612
        %v614 = vsel %vm304, %v613, 0
        %616 = vmatpush.msra.mxu0 0.0
        %617 = vmatpush.msra.mxu0 0.0
        %618 = vmatpush.msra.mxu0 0.0
        %619 = vmatpush.msra.mxu0 0.0
        %620 = vmatpush.msra.mxu0 0.0
        %621 = vmatpush.msra.mxu0 0.0
        %622 = vmatpush.msra.mxu0 0.0
        %623 = vmatpush.msra.mxu0 0.0
        %624 = vmatpush.msra.mxu0 %v282
        %625 = vmatpush.msra.mxu0 %v280
        %626 = vmatpush.msra.mxu0 %v278
        %627 = vmatpush.msra.mxu0 %v276
        %628 = vmatpush.msra.mxu0 %v274
        %629 = vmatpush.msra.mxu0 %v272
        %630 = vmatpush.msra.mxu0 %v270
        %631 = vmatpush.msra.mxu0 %v268
        %632 = vmatmul.f32.gmra.mxu0 %v614
        %v633 = vpop.f32.mrf.mxu0
        %v634 = vadd.f32 0.0, %v633
        %635 = vdwg.mxu0
        %636 = vmatpush.msra.mxu0 0.0
        %637 = vmatpush.msra.mxu0 0.0
        %638 = vmatpush.msra.mxu0 0.0
        %639 = vmatpush.msra.mxu0 0.0
        %640 = vmatpush.msra.mxu0 0.0
        %641 = vmatpush.msra.mxu0 0.0
        %642 = vmatpush.msra.mxu0 0.0
        %643 = vmatpush.msra.mxu0 0.0
        %644 = vmatpush.msra.mxu0 %v283
        %645 = vmatpush.msra.mxu0 %v281
        %646 = vmatpush.msra.mxu0 %v279
        %647 = vmatpush.msra.mxu0 %v277
        %648 = vmatpush.msra.mxu0 %v275
        %649 = vmatpush.msra.mxu0 %v273
        %650 = vmatpush.msra.mxu0 %v271
        %651 = vmatpush.msra.mxu0 %v269
        %652 = vmatmul.f32.gmra.mxu0 %v614
        %v653 = vpop.f32.mrf.mxu0
        %v654 = vadd.f32 0.0, %v653
        %655 = vdwg.mxu0
        %v656 = vadd.f32 %v589, %v634
        %v657 = vadd.f32 %v609, %v654
        %v658 = vmul.f32 %v656, 0.5
        %v659 = vmul.f32 %v657, 0.5
        %v660 = vsel %vm294, %v656, %v658
        %v661 = vsel %vm295, %v657, %v659
        %v662 = vtanh.pop %v660
        %v663 = vtanh.pop %v661
        %v664 = vmul.f32 %v662, 0.5
        %v665 = vmul.f32 %v663, 0.5
        %v666 = vadd.f32 %v664, 0.5
        %v667 = vadd.f32 %v665, 0.5
        %v668 = vsel %vm294, %v662, %v666
        %v669 = vsel %vm295, %v663, %v667
        %v670 = vmul.f32 %v668, %v565
        %v671 = vmul.f32 %v668, %v669
        %673 = vrot.lane.b32.xlu0 %v671, 64
        %v674 = vpop.permute.xlu0 %673
        %v676 = vadd.f32 %v670, %v674
        %v677 = vtanh.pop %v676
        %v678 = vmul.f32 %v669, %v677
        %s679 = sadd.s32 %s286, 2
        %v680 = vstv %s679
        %vm681 = vcmp.lt.s32.totalorder %v680, %v285
        %v682 = vsel %vm681, 1, 0
        %683 = vset.pattern.permute.xlu0 0
        %684 = vperm.xlu0 %683, %v682
        %v685 = vpop.permute.xlu0 %684
        %vm686 = vcmp.eq.s32.totalorder %v685, 1
        %v687 = vsel %vm686, %v678, 0.0
        %689 = vrot.lane.b32.xlu0 %v687, 64
        %v690 = vpop.permute.xlu0 %689
        %s692 = scalar_lea.vmem %s243, 16
        %693 = vst.msk [vmem:[%s692] sm:$0xff] %vm304, %v690
        %v694 = vsel %vm686, %v678, %v564
        %v695 = vsel %vm686, %v676, %v565
        %s696 = scalar_lea.vmem %s237, 24
        %v697 = vld [vmem:[%s696] sm:$0xff]
        %v699 = vsel %vm304, %v697, 0
        %701 = vmatpush.msra.mxu0 0.0
        %702 = vmatpush.msra.mxu0 0.0
        %703 = vmatpush.msra.mxu0 0.0
        %704 = vmatpush.msra.mxu0 0.0
        %705 = vmatpush.msra.mxu0 0.0
        %706 = vmatpush.msra.mxu0 0.0
        %707 = vmatpush.msra.mxu0 0.0
        %708 = vmatpush.msra.mxu0 0.0
        %709 = vmatpush.msra.mxu0 %v266
        %710 = vmatpush.msra.mxu0 %v264
        %711 = vmatpush.msra.mxu0 %v262
        %712 = vmatpush.msra.mxu0 %v260
        %713 = vmatpush.msra.mxu0 %v258
        %714 = vmatpush.msra.mxu0 %v256
        %715 = vmatpush.msra.mxu0 %v254
        %716 = vmatpush.msra.mxu0 %v252
        %717 = vmatmul.f32.gmra.mxu0 %v699
        %v718 = vpop.f32.mrf.mxu0
        %v719 = vadd.f32 %v300, %v718
        %720 = vdwg.mxu0
        %721 = vmatpush.msra.mxu0 0.0
        %722 = vmatpush.msra.mxu0 0.0
        %723 = vmatpush.msra.mxu0 0.0
        %724 = vmatpush.msra.mxu0 0.0
        %725 = vmatpush.msra.mxu0 0.0
        %726 = vmatpush.msra.mxu0 0.0
        %727 = vmatpush.msra.mxu0 0.0
        %728 = vmatpush.msra.mxu0 0.0
        %729 = vmatpush.msra.mxu0 %v267
        %730 = vmatpush.msra.mxu0 %v265
        %731 = vmatpush.msra.mxu0 %v263
        %732 = vmatpush.msra.mxu0 %v261
        %733 = vmatpush.msra.mxu0 %v259
        %734 = vmatpush.msra.mxu0 %v257
        %735 = vmatpush.msra.mxu0 %v255
        %736 = vmatpush.msra.mxu0 %v253
        %737 = vmatmul.f32.gmra.mxu0 %v699
        %v738 = vpop.f32.mrf.mxu0
        %v739 = vadd.f32 %v301, %v738
        %740 = vdwg.mxu0
        %742 = vrot.lane.b32.xlu0 %v694, 64
        %v743 = vpop.permute.xlu0 %742
        %v744 = vsel %vm304, %v743, 0
        %746 = vmatpush.msra.mxu0 0.0
        %747 = vmatpush.msra.mxu0 0.0
        %748 = vmatpush.msra.mxu0 0.0
        %749 = vmatpush.msra.mxu0 0.0
        %750 = vmatpush.msra.mxu0 0.0
        %751 = vmatpush.msra.mxu0 0.0
        %752 = vmatpush.msra.mxu0 0.0
        %753 = vmatpush.msra.mxu0 0.0
        %754 = vmatpush.msra.mxu0 %v282
        %755 = vmatpush.msra.mxu0 %v280
        %756 = vmatpush.msra.mxu0 %v278
        %757 = vmatpush.msra.mxu0 %v276
        %758 = vmatpush.msra.mxu0 %v274
        %759 = vmatpush.msra.mxu0 %v272
        %760 = vmatpush.msra.mxu0 %v270
        %761 = vmatpush.msra.mxu0 %v268
        %762 = vmatmul.f32.gmra.mxu0 %v744
        %v763 = vpop.f32.mrf.mxu0
        %v764 = vadd.f32 0.0, %v763
        %765 = vdwg.mxu0
        %766 = vmatpush.msra.mxu0 0.0
        %767 = vmatpush.msra.mxu0 0.0
        %768 = vmatpush.msra.mxu0 0.0
        %769 = vmatpush.msra.mxu0 0.0
        %770 = vmatpush.msra.mxu0 0.0
        %771 = vmatpush.msra.mxu0 0.0
        %772 = vmatpush.msra.mxu0 0.0
        %773 = vmatpush.msra.mxu0 0.0
        %774 = vmatpush.msra.mxu0 %v283
        %775 = vmatpush.msra.mxu0 %v281
        %776 = vmatpush.msra.mxu0 %v279
        %777 = vmatpush.msra.mxu0 %v277
        %778 = vmatpush.msra.mxu0 %v275
        %779 = vmatpush.msra.mxu0 %v273
        %780 = vmatpush.msra.mxu0 %v271
        %781 = vmatpush.msra.mxu0 %v269
        %782 = vmatmul.f32.gmra.mxu0 %v744
        %v783 = vpop.f32.mrf.mxu0
        %v784 = vadd.f32 0.0, %v783
        %785 = vdwg.mxu0
        %v786 = vadd.f32 %v719, %v764
        %v787 = vadd.f32 %v739, %v784
        %v788 = vmul.f32 %v786, 0.5
        %v789 = vmul.f32 %v787, 0.5
        %v790 = vsel %vm294, %v786, %v788
        %v791 = vsel %vm295, %v787, %v789
        %v792 = vtanh.pop %v790
        %v793 = vtanh.pop %v791
        %v794 = vmul.f32 %v792, 0.5
        %v795 = vmul.f32 %v793, 0.5
        %v796 = vadd.f32 %v794, 0.5
        %v797 = vadd.f32 %v795, 0.5
        %v798 = vsel %vm294, %v792, %v796
        %v799 = vsel %vm295, %v793, %v797
        %v800 = vmul.f32 %v798, %v695
        %v801 = vmul.f32 %v798, %v799
        %803 = vrot.lane.b32.xlu0 %v801, 64
        %v804 = vpop.permute.xlu0 %803
        %v806 = vadd.f32 %v800, %v804
        %v807 = vtanh.pop %v806
        %v808 = vmul.f32 %v799, %v807
        %s809 = sadd.s32 %s286, 3
        %v810 = vstv %s809
        %vm811 = vcmp.lt.s32.totalorder %v810, %v285
        %v812 = vsel %vm811, 1, 0
        %813 = vset.pattern.permute.xlu0 0
        %814 = vperm.xlu0 %813, %v812
        %v815 = vpop.permute.xlu0 %814
        %vm816 = vcmp.eq.s32.totalorder %v815, 1
        %v817 = vsel %vm816, %v808, 0.0
        %819 = vrot.lane.b32.xlu0 %v817, 64
        %v820 = vpop.permute.xlu0 %819
        %s822 = scalar_lea.vmem %s243, 24
        %823 = vst.msk [vmem:[%s822] sm:$0xff] %vm304, %v820
        %v824 = vsel %vm816, %v808, %v694
        %v825 = vsel %vm816, %v806, %v695
        %827 = vrot.lane.b32.xlu0 %v824, 64
        %v828 = vpop.permute.xlu0 %827
        %830 = vst.msk [vmem:[#allocation2] sm:$0xff] %vm304, %v828
        %832 = vrot.lane.b32.xlu0 %v825, 64
        %v833 = vpop.permute.xlu0 %832
        %835 = vst.msk [vmem:[#allocation3] sm:$0xff] %vm304, %v833
        %s836 = smul.u32 4, %s17
        %p837 = scmp.lt.s32.totalorder %s836, 7
        %s838 = scalar_select %p837, %s836, 7
        %s839 = smul.addr %s838, 8
        %s840 = scalar_lea.vmem %s5, %s839
        // Predicated region
        $region49: #{hoare_lstm_forward.1} parent=39 // pred_check
          %p841 = pneg %p145
        $region50: #{hoare_lstm_forward.1} parent=39 // pred_check_branch
          %843 = sbr.rel (%p841) target = $region52
        $region51: #{hoare_lstm_forward.1} parent=39 // pred_region
          %s844 = smul.u32 4, %s17
        $region52: #{hoare_lstm_forward.1} parent=39 // pred_fallthru
          _
      $region40: #{hoare_lstm_forward.1} parent=5 // pred_fallthru
        _
      %p845 = scmp.le.s32.totalorder 2, %s12
      // Predicated region
      $region53: #{hoare_lstm_forward.1} parent=5 // pred_check
        %p846 = pneg %p845
      $region54: #{hoare_lstm_forward.1} parent=5 // pred_check_branch
        %848 = sbr.rel (%p846) target = $region56
      $region55: #{hoare_lstm_forward.1} parent=5 // pred_region
        %s849 = ssub.s32 %s12, 2
        // Predicated region
        $region57: #{hoare_lstm_forward.1} parent=55 // pred_check
          %p850 = pneg %p151
        $region58: #{hoare_lstm_forward.1} parent=55 // pred_check_branch
          %852 = sbr.rel (%p850) target = $region60
        $region59: #{hoare_lstm_forward.1} parent=55 // pred_region
          %s853 = smul.u32 4, %s18
          %p854 = scmp.lt.s32.totalorder %s853, 7
          %s855 = scalar_select %p854, %s853, 7
          %s856 = smul.addr %s855, 8
          %s857 = scalar_lea.vmem %s5, %s856
        $region60: #{hoare_lstm_forward.1} parent=55 // pred_fallthru
          _
      $region56: #{hoare_lstm_forward.1} parent=5 // pred_fallthru
        _
    $region6: #{hoare_lstm_forward.1} parent=1 // loop_footer
      %s16 = sadd.s32 1, %s12
    $region7: #{hoare_lstm_forward.1} parent=1 // loop_footer_branch
      %11 = sbr.rel target = $region3
    $region8: #{hoare_lstm_forward.1} parent=1 // loop_exit
      _
    %858 = vsyncpa [#allocation5], 1
    %s859 = scalar_lea.sflag [#allocation5], 1
    %860 = vsyncpa %s859, 1

</llo_original>
